<compile_context>
chip_gen: v6e
topology: v6e:2x2x1
jax: 0.10.0
libtpu: 0.0.40
codegen_flags: <defaults>
</compile_context>

<pallas_src>
import functools
import math

import jax
import jax.numpy as jnp
from jax.experimental import pallas as pl
from jax.experimental.pallas import tpu as pltpu


# ----------------------------- VMEM sizing helpers -----------------------------

def _physical_vmem_bytes():
    """Best-effort query of per-core VMEM; conservative fallback = 64 MiB (v7x)."""
    try:
        info = pltpu.get_tpu_info()
        for attr in ("vmem_capacity_bytes", "vmem_size_bytes", "vmem_bytes"):
            v = getattr(info, attr, None)
            if v:
                return int(v)
    except Exception:
        pass
    return 64 * 1024 * 1024


def _vmem_limit_bytes():
    phys = _physical_vmem_bytes()
    # Well above the 16/32 MiB scoped defaults but below physical, with headroom.
    return int(max(32 * 1024 * 1024, min(phys * 3 // 4, 96 * 1024 * 1024)))


def _auto_row_tile(rows, d, itemsize, vmem_limit):
    """Largest 8-aligned row tile so double-buffered (1 in + 2 out) tiles fit comfortably."""
    per_row = max(1, d * itemsize)
    # 1 input + 2 outputs, each double-buffered => 6 live row-tile buffers; use ~half the
    # scoped limit so the compiler keeps headroom for f32 intermediates / regalloc.
    t = (vmem_limit // 2) // (6 * per_row)
    t = max(8, min((t // 8) * 8, 1024))
    if rows >= 8:
        t = min(t, (rows // 8) * 8)   # keep block <= array extent, 8-aligned
    else:
        t = rows                      # tiny case: block equals the full row extent
    return t


# --------------------------------- the kernel ----------------------------------

def _fused_double_norm_kernel(x_ref, gb_ref, o1_ref, o2_ref, *, eps):
    """Computes x_1 = LN(x) and out_2 = LN(x_1) in one pass over the row tile."""
    gamma = gb_ref[0:1, :]                          # (1, D) resident, f32
    beta = gb_ref[1:2, :]                           # (1, D)
    d = x_ref.shape[-1]
    inv_nm1 = 1.0 / (d - 1)                         # torch.std default: unbiased (n-1)

    def _norm(t):                                   # t: (row_tile, D) f32
        mean = jnp.mean(t, axis=-1, keepdims=True)
        diff = t - mean
        var = jnp.sum(diff * diff, axis=-1, keepdims=True) * inv_nm1
        # Per-row reciprocal (tiny) + full-tile multiply instead of a full-tile divide.
        inv = pl.reciprocal(jnp.sqrt(var) + eps, approx=False)
        return diff * inv * gamma + beta

    x = x_ref[...].astype(jnp.float32)
    # TODO(synk): layer_1(x, mask) is undefined in the spec (only layer.d_model is used);
    # applied as identity here rather than faking a transformer sub-layer.
    x1 = _norm(x)
    o1_ref[...] = x1.astype(o1_ref.dtype)

    # TODO(synk): layer_2(x_1, mask) likewise undefined; applied as identity, which is
    # what makes this fusion (out_2 = LN(LN(x))) valid without an HBM round-trip.
    o2_ref[...] = _norm(x1).astype(o2_ref.dtype)


def memory_encoder_pallas(x, gamma, beta, *, eps=1e-6, row_tile=None):
    """Fused Memory_encoder forward: returns (x_1, norm(x_2)) with identity sub-layers.

    x: (..., D). I/O stays in x.dtype; compute is f32 in-kernel.
    """
    orig_shape = x.shape
    D = orig_shape[-1]
    assert D >= 2, "feature dim must be >= 2 for the unbiased (n-1) std"
    rows = math.prod(orig_shape[:-1])

    vmem_limit = _vmem_limit_bytes()
    if row_tile is None:
        row_tile = _auto_row_tile(rows, D, jnp.dtype(x.dtype).itemsize, vmem_limit)

    x2 = x.reshape(rows, D)
    # Pack gamma/beta into one resident (2, D) f32 input -> a single DMA stream.
    gb = jnp.stack(
        [gamma.reshape(D).astype(jnp.float32), beta.reshape(D).astype(jnp.float32)],
        axis=0,
    )

    n_tiles = pl.cdiv(rows, row_tile)
    row_spec = pl.BlockSpec((row_tile, D), lambda i: (i, 0))

    x_1, out_2 = pl.pallas_call(
        functools.partial(_fused_double_norm_kernel, eps=eps),
        out_shape=(
            jax.ShapeDtypeStruct((rows, D), x.dtype),
            jax.ShapeDtypeStruct((rows, D), x.dtype),
        ),
        grid_spec=pltpu.PrefetchScalarGridSpec(
            num_scalar_prefetch=0,
            grid=(n_tiles,),
            in_specs=[
                row_spec,                                # x row tile
                pl.BlockSpec((2, D), lambda i: (0, 0)),  # gamma/beta (resident)
            ],
            out_specs=[row_spec, row_spec],
        ),
        compiler_params=pltpu.CompilerParams(
            dimension_semantics=("parallel",),   # shards rows across v7x's 2 TCs
            vmem_limit_bytes=vmem_limit,
        ),
    )(x2, gb)
    return x_1.reshape(orig_shape), out_2.reshape(orig_shape)


# ---------------------------- Memory_encoder forward ----------------------------

def init_memory_encoder_params(d_model, n_layers=2):
    assert n_layers >= 2, "Memory_encoder.forward uses layers[0] and layers[1]"
    # LayerNorm params exactly as in the module: gamma=ones(D), beta=zeros(D).
    return {
        "N": n_layers,
        "gamma": jnp.ones((d_model,), jnp.float32),
        "beta": jnp.zeros((d_model,), jnp.float32),
        "eps": 1e-6,
    }


def memory_encoder_forward(x, mask, params):
    """Mirrors Memory_encoder.forward: returns (x_1, norm(x_2))."""
    # mask is only consumed by the opaque sub-layers (identity here); it is accepted for
    # API parity with the PyTorch module.
    del mask
    return memory_encoder_pallas(
        x, params["gamma"], params["beta"], eps=params["eps"]
    )


# ----------------------------------- test -----------------------------------

def _reference_layernorm(x, gamma, beta, eps=1e-6):
    # Pure-JAX replica of the PyTorch LayerNorm (unbiased std, eps added to std).
    mean = jnp.mean(x, axis=-1, keepdims=True)
    std = jnp.sqrt(jnp.sum((x - mean) ** 2, axis=-1, keepdims=True) / (x.shape[-1] - 1))
    return gamma * (x - mean) / (std + eps) + beta


if __name__ == "__main__":
    key = jax.random.PRNGKey(0)
    B, S, D = 2, 8, 128   # D multiple of 128 -> lane-dense blocks / unmasked stores

    k1, k2 = jax.random.split(key, 2)
    x = jax.random.normal(k1, (B, S, D), jnp.float32)
    mask = (jax.random.uniform(k2, (B, 1, S)) > 0.1).astype(jnp.float32)

    params = init_memory_encoder_params(D, n_layers=2)

    x_1, out_2 = memory_encoder_forward(x, mask, params)
    x_1, out_2 = jax.block_until_ready((x_1, out_2))

    ref_1 = _reference_layernorm(x, params["gamma"], params["beta"])
    ref_2 = _reference_layernorm(ref_1, params["gamma"], params["beta"])

    assert x_1.shape == x.shape and out_2.shape == x.shape
    assert jnp.allclose(x_1, ref_1, atol=1e-4, rtol=1e-4)
    assert jnp.allclose(out_2, ref_2, atol=1e-4, rtol=1e-4)

    print("KERNEL_OK")
</pallas_src>

<mosaic_0001>
module attributes {stable_mosaic.version = 11 : i64} {
  func.func @_fused_double_norm_kernel(%arg0: i32, %arg1: memref<16x128xf32, #tpu.memory_space<vmem>>, %arg2: memref<2x128xf32, #tpu.memory_space<vmem>>, %arg3: memref<16x128xf32, #tpu.memory_space<vmem>>, %arg4: memref<16x128xf32, #tpu.memory_space<vmem>>) attributes {dimension_semantics = [#tpu.dimension_semantics<parallel>], iteration_bounds = array<i64: 1>, scalar_prefetch = 0 : i64, scratch_operands = 0 : i64, tpu.core_type = #tpu.core_type<tc>, window_params = [{transform_indices = @transform_0, window_bounds = array<i64: 16, 128>}, {pipeline_mode = #tpu.pipeline_mode<synchronous>, transform_indices = @transform_1, window_bounds = array<i64: 2, 128>}, {transform_indices = @transform_2, window_bounds = array<i64: 16, 128>}, {transform_indices = @transform_3, window_bounds = array<i64: 16, 128>}]} {
    %c0 = arith.constant 0 : index
    %c0_0 = arith.constant 0 : index
    %0 = vector.load %arg2[%c0, %c0_0] : memref<2x128xf32, #tpu.memory_space<vmem>>, vector<1x128xf32>
    %c1 = arith.constant 1 : index
    %c0_1 = arith.constant 0 : index
    %1 = vector.load %arg2[%c1, %c0_1] : memref<2x128xf32, #tpu.memory_space<vmem>>, vector<1x128xf32>
    %c0_2 = arith.constant 0 : index
    %c0_3 = arith.constant 0 : index
    %2 = vector.load %arg1[%c0_2, %c0_3] : memref<16x128xf32, #tpu.memory_space<vmem>>, vector<16x128xf32>
    %cst = arith.constant dense<0.000000e+00> : vector<16xf32>
    %3 = vector.multi_reduction <add>, %2, %cst [1] : vector<16x128xf32> to vector<16xf32>
    %4 = vector.shape_cast %3 : vector<16xf32> to vector<16x1xf32>
    %cst_4 = arith.constant 1.280000e+02 : f32
    %5 = vector.broadcast %cst_4 : f32 to vector<16x1xf32>
    %6 = arith.divf %4, %5 : vector<16x1xf32>
    %7 = vector.broadcast %6 : vector<16x1xf32> to vector<16x128xf32>
    %8 = arith.subf %2, %7 : vector<16x128xf32>
    %9 = arith.mulf %8, %8 : vector<16x128xf32>
    %cst_5 = arith.constant dense<0.000000e+00> : vector<16xf32>
    %10 = vector.multi_reduction <add>, %9, %cst_5 [1] : vector<16x128xf32> to vector<16xf32>
    %11 = vector.shape_cast %10 : vector<16xf32> to vector<16x1xf32>
    %cst_6 = arith.constant 0.00787401571 : f32
    %12 = vector.broadcast %cst_6 : f32 to vector<16x1xf32>
    %13 = arith.mulf %11, %12 : vector<16x1xf32>
    %14 = math.sqrt %13 : vector<16x1xf32>
    %cst_7 = arith.constant 9.99999997E-7 : f32
    %15 = vector.broadcast %cst_7 : f32 to vector<16x1xf32>
    %16 = arith.addf %14, %15 : vector<16x1xf32>
    %17 = tpu.reciprocal %16 : vector<16x1xf32> -> vector<16x1xf32>
    %18 = vector.broadcast %17 : vector<16x1xf32> to vector<16x128xf32>
    %19 = arith.mulf %8, %18 : vector<16x128xf32>
    %20 = vector.broadcast %0 : vector<1x128xf32> to vector<16x128xf32>
    %21 = arith.mulf %19, %20 : vector<16x128xf32>
    %22 = vector.broadcast %1 : vector<1x128xf32> to vector<16x128xf32>
    %23 = arith.addf %21, %22 : vector<16x128xf32>
    %c0_8 = arith.constant 0 : index
    %c0_9 = arith.constant 0 : index
    %24 = vector.load %arg3[%c0_8, %c0_9] : memref<16x128xf32, #tpu.memory_space<vmem>>, vector<16x128xf32>
    tpu.vector_store %arg3[%c0_8, %c0_9], %23 {strides = array<i32>} : memref<16x128xf32, #tpu.memory_space<vmem>>, vector<16x128xf32>,
    %cst_10 = arith.constant dense<0.000000e+00> : vector<16xf32>
    %25 = vector.multi_reduction <add>, %23, %cst_10 [1] : vector<16x128xf32> to vector<16xf32>
    %26 = vector.shape_cast %25 : vector<16xf32> to vector<16x1xf32>
    %cst_11 = arith.constant 1.280000e+02 : f32
    %27 = vector.broadcast %cst_11 : f32 to vector<16x1xf32>
    %28 = arith.divf %26, %27 : vector<16x1xf32>
    %29 = vector.broadcast %28 : vector<16x1xf32> to vector<16x128xf32>
    %30 = arith.subf %23, %29 : vector<16x128xf32>
    %31 = arith.mulf %30, %30 : vector<16x128xf32>
    %cst_12 = arith.constant dense<0.000000e+00> : vector<16xf32>
    %32 = vector.multi_reduction <add>, %31, %cst_12 [1] : vector<16x128xf32> to vector<16xf32>
    %33 = vector.shape_cast %32 : vector<16xf32> to vector<16x1xf32>
    %cst_13 = arith.constant 0.00787401571 : f32
    %34 = vector.broadcast %cst_13 : f32 to vector<16x1xf32>
    %35 = arith.mulf %33, %34 : vector<16x1xf32>
    %36 = math.sqrt %35 : vector<16x1xf32>
    %cst_14 = arith.constant 9.99999997E-7 : f32
    %37 = vector.broadcast %cst_14 : f32 to vector<16x1xf32>
    %38 = arith.addf %36, %37 : vector<16x1xf32>
    %39 = tpu.reciprocal %38 : vector<16x1xf32> -> vector<16x1xf32>
    %40 = vector.broadcast %39 : vector<16x1xf32> to vector<16x128xf32>
    %41 = arith.mulf %30, %40 : vector<16x128xf32>
    %42 = vector.broadcast %0 : vector<1x128xf32> to vector<16x128xf32>
    %43 = arith.mulf %41, %42 : vector<16x128xf32>
    %44 = vector.broadcast %1 : vector<1x128xf32> to vector<16x128xf32>
    %45 = arith.addf %43, %44 : vector<16x128xf32>
    %c0_15 = arith.constant 0 : index
    %c0_16 = arith.constant 0 : index
    %46 = vector.load %arg4[%c0_15, %c0_16] : memref<16x128xf32, #tpu.memory_space<vmem>>, vector<16x128xf32>
    tpu.vector_store %arg4[%c0_15, %c0_16], %45 {strides = array<i32>} : memref<16x128xf32, #tpu.memory_space<vmem>>, vector<16x128xf32>,
    return
  }
  func.func @transform_0(%arg0: i32) -> (i32, i32) {
    %c0_i32 = arith.constant 0 : i32
    %c0_i32_0 = arith.constant 0 : i32
    return %arg0, %c0_i32 : i32, i32
  }
  func.func @transform_1(%arg0: i32) -> (i32, i32) {
    %c0_i32 = arith.constant 0 : i32
    %c0_i32_0 = arith.constant 0 : i32
    %c0_i32_1 = arith.constant 0 : i32
    return %c0_i32, %c0_i32_0 : i32, i32
  }
  func.func @transform_2(%arg0: i32) -> (i32, i32) {
    %c0_i32 = arith.constant 0 : i32
    %c0_i32_0 = arith.constant 0 : i32
    return %arg0, %c0_i32 : i32, i32
  }
  func.func @transform_3(%arg0: i32) -> (i32, i32) {
    %c0_i32 = arith.constant 0 : i32
    %c0_i32_0 = arith.constant 0 : i32
    return %arg0, %c0_i32 : i32, i32
  }
}

</mosaic_0001>

<llo_original>
// kernel: tpu_custom_call.1
$region0: #{tpu_custom_call.1}
  #allocation0 [shape = 'u32[]', space=smem, size = 0x4, offset = 0x4, fixed_abs, tag = 'smem constant byte address 0x4 - core index']
  #allocation1 [shape = 'u32[144,128]{1,0:T(1,128)}', space=vmem, size = 0x12000, scoped, tag = 'internal scratch']
  %s0 = inlined_call_operand.hbm [shape: f32[16,128], index: 0, kind: input, shape index: {}]
  %s1 = inlined_call_operand.hbm [shape: f32[2,128], index: 1, kind: input, shape index: {}]
  %s2 = inlined_call_operand.hbm [shape: f32[16,128], index: 2, kind: output, shape index: {0}]
  %s3 = inlined_call_operand.hbm [shape: f32[16,128], index: 3, kind: output, shape index: {1}]
  %4 = xla_tuple %s2, %s3
  %s5 = sld [smem:[#allocation0]]
  $region34: #{tpu_custom_call.1} parent=0
    _
  %s7 = ssub.s32 1, %s5
  %s8 = scalar_select 0, %s7, %s5
  $region1: #{tpu_custom_call.1} parent=0
    #allocation2 [shape = 'u8[8192]{0}', space=vmem, size = 0x2000, scoped, tag = 'input window, operand 0, single buffered']
    #allocation3 [shape = 's32[1]{0}', space=sflag, size = 0x4, scoped, tag = 'scoped memory for tpu_custom_call.1']
    #allocation4 [shape = 's32[1]{0}', space=sflag, size = 0x4, scoped, tag = 'scoped memory for tpu_custom_call.1']
    #allocation5 [shape = 'u8[1024]{0}', space=vmem, size = 0x400, scoped, tag = 'input window, operand 1, single buffered']
    #allocation6 [shape = 's32[1]{0}', space=sflag, size = 0x4, scoped, tag = 'scoped memory for tpu_custom_call.1']
    #allocation7 [shape = 'u8[8192]{0}', space=vmem, size = 0x2000, scoped, tag = 'output window, operand 0, single buffered']
    #allocation8 [shape = 'u8[8192]{0}', space=vmem, size = 0x2000, scoped, tag = 'output window, operand 1, single buffered']
    #allocation9 [shape = 's32[1]{0}', space=sflag, size = 0x4, scoped, tag = 'scoped memory for tpu_custom_call.1']
    %9 = vsyncpa [#allocation3], 0
    %10 = vsyncpa [#allocation6], 0
    %11 = vsyncpa [#allocation4], 0
    %12 = vsyncpa [#allocation9], 0
    // Predicated region
    $region2: #{tpu_custom_call.1} parent=1 // pred_check
      _
    $region3: #{tpu_custom_call.1} parent=1 // pred_check_branch
      %14 = sbr.rel (0) target = $region5
    $region4: #{tpu_custom_call.1} parent=1 // pred_region
      %s16 = ssub.s32 256, 256
      %17 = vsyncadd [#allocation3], %s16
      %s18 = sshll.u32 [#allocation2], 4
      %s19 = int_to_ptr.vmem [resolvable:$true] %s18
      %24 = dma.hbm_to_vmem [thread:$0]  %s0, 256, %s19, [#allocation3], 128, 128, 8
    $region5: #{tpu_custom_call.1} parent=1 // pred_fallthru
      _
    // Predicated region
    $region6: #{tpu_custom_call.1} parent=1 // pred_check
      _
    $region7: #{tpu_custom_call.1} parent=1 // pred_check_branch
      %26 = sbr.rel (0) target = $region9
    $region8: #{tpu_custom_call.1} parent=1 // pred_region
      %s28 = ssub.s32 32, 32
      %29 = vsyncadd [#allocation6], %s28
      %s31 = sshll.u32 [#allocation5], 4
      %s32 = int_to_ptr.vmem [resolvable:$true] %s31
      %34 = dma.hbm_to_vmem [thread:$0]  %s1, 32, %s32, [#allocation6]
    $region9: #{tpu_custom_call.1} parent=1 // pred_fallthru
      _
    // Predicated region
    $region10: #{tpu_custom_call.1} parent=1 // pred_check
      _
    $region11: #{tpu_custom_call.1} parent=1 // pred_check_branch
      %36 = sbr.rel (0) target = $region13
    $region12: #{tpu_custom_call.1} parent=1 // pred_region
      %37 = dma.done [#allocation3], 256
    $region13: #{tpu_custom_call.1} parent=1 // pred_fallthru
      _
    // Predicated region
    $region14: #{tpu_custom_call.1} parent=1 // pred_check
      _
    $region15: #{tpu_custom_call.1} parent=1 // pred_check_branch
      %39 = sbr.rel (0) target = $region17
    $region16: #{tpu_custom_call.1} parent=1 // pred_region
      %40 = dma.done [#allocation6], 32
    $region17: #{tpu_custom_call.1} parent=1 // pred_fallthru
      _
    %v41 = vld [vmem:[#allocation5] sm:$0x1]
    %v42 = vld [vmem:[#allocation5 + $0x1] sm:$0x1]
    %v43 = vld [vmem:[#allocation2] sm:$0xff]
    %v44 = vld [vmem:[#allocation2 + $0x8] sm:$0xff]
    %45 = vadd.xlane.f32.xlu0 %v43
    %v46 = vpop.xlane.xlu0 %45
    %47 = vadd.xlane.f32.xlu0 %v44
    %v48 = vpop.xlane.xlu0 %47
    %v49 = vrcp.pop 128.0
    %v50 = vmul.f32 %v46, %v49
    %v51 = vmul.f32 %v48, %v49
    %v52 = vsub.f32 %v43, %v50
    %v53 = vsub.f32 %v44, %v51
    %v54 = vmul.f32 %v52, %v52
    %v55 = vmul.f32 %v53, %v53
    %56 = vadd.xlane.f32.xlu0 %v54
    %v57 = vpop.xlane.xlu0 %56
    %58 = vadd.xlane.f32.xlu0 %v55
    %v59 = vpop.xlane.xlu0 %58
    %v60 = vmul.f32 %v57, 0.007874016
    %v61 = vmul.f32 %v59, 0.007874016
    %v62 = vrsqrt.pop %v60
    %v63 = vmul.f32 %v60, %v62
    %vm64 = vcmp.eq.f32.partialorder %v60, inf
    %v65 = vsel %vm64, %v60, %v63
    %vm66 = vcmp.eq.f32.partialorder %v60, 0.0
    %v67 = vand.u32 %v60, 2147483648
    %v68 = vsel %vm66, %v67, %v65
    %v69 = vrsqrt.pop %v61
    %v70 = vmul.f32 %v61, %v69
    %vm71 = vcmp.eq.f32.partialorder %v61, inf
    %v72 = vsel %vm71, %v61, %v70
    %vm73 = vcmp.eq.f32.partialorder %v61, 0.0
    %v74 = vand.u32 %v61, 2147483648
    %v75 = vsel %vm73, %v74, %v72
    %v76 = vadd.f32 %v68, 1e-06
    %v77 = vadd.f32 %v75, 1e-06
    %v78 = vrcp.pop %v76
    %v79 = vrcp.pop %v77
    %v80 = vmul.f32 %v52, %v78
    %v81 = vmul.f32 %v53, %v79
    %v82 = vlaneseq
    %v83 = vshrl.u32 %v82, 7
    %v84 = vsub.s32 0, %v83
    %v85 = vrot.slane %v41, %v84
    %v86 = vmul.f32 %v80, %v85
    %v87 = vmul.f32 %v81, %v85
    %v88 = vlaneseq
    %v89 = vshrl.u32 %v88, 7
    %v90 = vsub.s32 0, %v89
    %v91 = vrot.slane %v42, %v90
    %v92 = vadd.f32 %v86, %v91
    %v93 = vadd.f32 %v87, %v91
    %94 = vst [vmem:[#allocation7] sm:$0xff] %v92
    %95 = vst [vmem:[#allocation7 + $0x8] sm:$0xff] %v93
    %96 = vadd.xlane.f32.xlu0 %v92
    %v97 = vpop.xlane.xlu0 %96
    %98 = vadd.xlane.f32.xlu0 %v93
    %v99 = vpop.xlane.xlu0 %98
    %v100 = vmul.f32 %v97, %v49
    %v101 = vmul.f32 %v99, %v49
    %v102 = vsub.f32 %v92, %v100
    %v103 = vsub.f32 %v93, %v101
    %v104 = vmul.f32 %v102, %v102
    %v105 = vmul.f32 %v103, %v103
    %106 = vadd.xlane.f32.xlu0 %v104
    %v107 = vpop.xlane.xlu0 %106
    %108 = vadd.xlane.f32.xlu0 %v105
    %v109 = vpop.xlane.xlu0 %108
    %v110 = vmul.f32 %v107, 0.007874016
    %v111 = vmul.f32 %v109, 0.007874016
    %v112 = vrsqrt.pop %v110
    %v113 = vmul.f32 %v110, %v112
    %vm114 = vcmp.eq.f32.partialorder %v110, inf
    %v115 = vsel %vm114, %v110, %v113
    %vm116 = vcmp.eq.f32.partialorder %v110, 0.0
    %v117 = vand.u32 %v110, 2147483648
    %v118 = vsel %vm116, %v117, %v115
    %v119 = vrsqrt.pop %v111
    %v120 = vmul.f32 %v111, %v119
    %vm121 = vcmp.eq.f32.partialorder %v111, inf
    %v122 = vsel %vm121, %v111, %v120
    %vm123 = vcmp.eq.f32.partialorder %v111, 0.0
    %v124 = vand.u32 %v111, 2147483648
    %v125 = vsel %vm123, %v124, %v122
    %v126 = vadd.f32 %v118, 1e-06
    %v127 = vadd.f32 %v125, 1e-06
    %v128 = vrcp.pop %v126
    %v129 = vrcp.pop %v127
    %v130 = vmul.f32 %v102, %v128
    %v131 = vmul.f32 %v103, %v129
    %v132 = vmul.f32 %v130, %v85
    %v133 = vmul.f32 %v131, %v85
    %v134 = vadd.f32 %v132, %v91
    %v135 = vadd.f32 %v133, %v91
    %136 = vst [vmem:[#allocation8] sm:$0xff] %v134
    %137 = vst [vmem:[#allocation8 + $0x8] sm:$0xff] %v135
    // Predicated region
    $region18: #{tpu_custom_call.1} parent=1 // pred_check
      _
    $region19: #{tpu_custom_call.1} parent=1 // pred_check_branch
      %139 = sbr.rel (0) target = $region21
    $region20: #{tpu_custom_call.1} parent=1 // pred_region
      %s141 = ssub.s32 256, 256
      %142 = vsyncadd [#allocation4], %s141
      %s143 = sshll.u32 [#allocation7], 4
      %s144 = int_to_ptr.vmem [resolvable:$true] %s143
      %149 = dma.vmem_to_hbm [thread:$0]  %s144, 256, %s2, [#allocation4], 128, 128, 8
    $region21: #{tpu_custom_call.1} parent=1 // pred_fallthru
      _
    // Predicated region
    $region22: #{tpu_custom_call.1} parent=1 // pred_check
      _
    $region23: #{tpu_custom_call.1} parent=1 // pred_check_branch
      %151 = sbr.rel (0) target = $region25
    $region24: #{tpu_custom_call.1} parent=1 // pred_region
      %s153 = ssub.s32 256, 256
      %154 = vsyncadd [#allocation9], %s153
      %s155 = sshll.u32 [#allocation8], 4
      %s156 = int_to_ptr.vmem [resolvable:$true] %s155
      %161 = dma.vmem_to_hbm [thread:$0]  %s156, 256, %s3, [#allocation9], 128, 128, 8
    $region25: #{tpu_custom_call.1} parent=1 // pred_fallthru
      _
    // Predicated region
    $region26: #{tpu_custom_call.1} parent=1 // pred_check
      _
    $region27: #{tpu_custom_call.1} parent=1 // pred_check_branch
      %163 = sbr.rel (0) target = $region29
    $region28: #{tpu_custom_call.1} parent=1 // pred_region
      %164 = dma.done [#allocation4], 256
    $region29: #{tpu_custom_call.1} parent=1 // pred_fallthru
      _
    // Predicated region
    $region30: #{tpu_custom_call.1} parent=1 // pred_check
      _
    $region31: #{tpu_custom_call.1} parent=1 // pred_check_branch
      %166 = sbr.rel (0) target = $region33
    $region32: #{tpu_custom_call.1} parent=1 // pred_region
      %167 = dma.done [#allocation9], 256
    $region33: #{tpu_custom_call.1} parent=1 // pred_fallthru
      _
    %168 = vsyncpa [#allocation3], 1
    %169 = vsyncpa [#allocation6], 1
    %170 = vsyncpa [#allocation4], 1
    %171 = vsyncpa [#allocation9], 1

</llo_original>
